<compile_context>
chip_gen: v7x
topology: tpu7x:2x2x1
jax: 0.10.0
libtpu: 0.0.40
codegen_flags: <defaults>
</compile_context>

<pallas_src>
import jax
import jax.numpy as jnp
from jax.experimental import pallas as pl
from jax.experimental.pallas import tpu as pltpu


def _round_up(n, m):
    return ((n + m - 1) // m) * m


# --------------------------------------------------------------------------
# Kernels
# --------------------------------------------------------------------------
def _graphconv_kernel(a_ref, xk_ref, xroot_ref, w_ref, b_ref, out_ref, acc_ref):
    """One (row-tile, K-tile) step of: tanh(A@x @ W_rel + x @ W_root + b)."""
    k = pl.program_id(1)

    @pl.when(k == 0)
    def _init():
        acc_ref[...] = jnp.zeros_like(acc_ref)

    # Native bf16 x bf16 -> f32 aggregation (no upcast of the A tile).
    acc_ref[...] += jnp.dot(a_ref[...], xk_ref[...],
                            preferred_element_type=jnp.float32)

    @pl.when(k == pl.num_programs(1) - 1)
    def _finish():
        kin = w_ref.shape[0] // 2
        h = (jnp.dot(acc_ref[...], w_ref[:kin, :],
                     preferred_element_type=jnp.float32)
             + jnp.dot(xroot_ref[...], w_ref[kin:, :],
                       preferred_element_type=jnp.float32)
             + b_ref[...])
        out_ref[...] = jnp.tanh(h)


def _graphconv_pool_kernel(a_ref, xk_ref, xroot_ref, w_ref, b_ref, ptT_ref,
                           out_ref, acc_ref):
    """Layer 2 + partial (already 1/|g|-weighted) mean pooling for one tile."""
    k = pl.program_id(1)

    @pl.when(k == 0)
    def _init():
        acc_ref[...] = jnp.zeros_like(acc_ref)

    acc_ref[...] += jnp.dot(a_ref[...], xk_ref[...],
                            preferred_element_type=jnp.float32)

    @pl.when(k == pl.num_programs(1) - 1)
    def _finish():
        kin = w_ref.shape[0] // 2
        x2 = jnp.tanh(jnp.dot(acc_ref[...], w_ref[:kin, :],
                              preferred_element_type=jnp.float32)
                      + jnp.dot(xroot_ref[...], w_ref[kin:, :],
                                preferred_element_type=jnp.float32)
                      + b_ref[...])
        # Pre-transposed pool matrix -> plain MXU matmul, lane-dense output.
        out_ref[...] = jnp.dot(ptT_ref[...], x2,
                               preferred_element_type=jnp.float32)[None, :, :]

    # TODO(synk): logger.record_mean side effects (pure logging) intentionally omitted.


# --------------------------------------------------------------------------
# Parameters
# --------------------------------------------------------------------------
def init_params(key, n_node_features=2, hidden_dim=64, output_dim=64):
    """Deterministic synthetic parameters with GraphConv-layer shapes."""
    ks = jax.random.split(key, 6)
    s1 = 1.0 / jnp.sqrt(jnp.float32(n_node_features))
    s2 = 1.0 / jnp.sqrt(jnp.float32(hidden_dim))
    return {
        "w1_rel":  jax.random.uniform(ks[0], (n_node_features, hidden_dim), jnp.float32, -s1, s1),
        "w1_root": jax.random.uniform(ks[1], (n_node_features, hidden_dim), jnp.float32, -s1, s1),
        "b1":      jax.random.uniform(ks[2], (1, hidden_dim), jnp.float32, -s1, s1),
        "w2_rel":  jax.random.uniform(ks[3], (hidden_dim, output_dim), jnp.float32, -s2, s2),
        "w2_root": jax.random.uniform(ks[4], (hidden_dim, output_dim), jnp.float32, -s2, s2),
        "b2":      jax.random.uniform(ks[5], (1, output_dim), jnp.float32, -s2, s2),
    }


# --------------------------------------------------------------------------
# Per-generation configuration & VMEM budgeting
# --------------------------------------------------------------------------
def _tpu_config():
    try:
        vmem_cap = int(pltpu.get_tpu_info().vmem_capacity_bytes)
        if vmem_cap <= 0:
            raise ValueError
    except Exception:
        vmem_cap = 64 << 20   # conservative fallback (v7x-class)
    if vmem_cap <= (64 << 20):          # v7x-class: 64 MiB VMEM, 2 TensorCores
        return dict(tile_cap=512, vmem_frac=0.70, vmem_cap=vmem_cap,
                    prefer_even_tiles=True)
    else:                               # v5e / v6e: 128 MiB VMEM, 1 TensorCore
        return dict(tile_cap=1024, vmem_frac=0.75, vmem_cap=vmem_cap,
                    prefer_even_tiles=False)


def _phys_bytes(shape, itemsize):
    """Physical VMEM bytes of one buffer, including (sublane, lane) padding."""
    s = list(shape)
    s[-1] = _round_up(s[-1], 128)
    if len(s) >= 2:
        sublane = 8 * max(1, 4 // itemsize)     # 8 rows / vreg for f32, 16 for bf16
        s[-2] = _round_up(s[-2], sublane)
    total = itemsize
    for d in s:
        total *= d
    return total


def _vmem_limit(row_tile, col_tile, f_in, f_out, g_pad, cfg, pool=False):
    est = 0
    est += 2 * _phys_bytes((row_tile, col_tile), 2)      # A tile stream (bf16, x2 buffers)
    est += 2 * _phys_bytes((col_tile, f_in), 2)          # feature K-stream (bf16)
    est += 2 * _phys_bytes((row_tile, f_in), 4)          # root-feature tile (f32)
    est += 2 * _phys_bytes((2 * f_in, f_out), 4)         # fused weights
    est += 2 * _phys_bytes((1, f_out), 4)                # bias
    est += _phys_bytes((row_tile, f_in), 4)              # aggregation accumulator scratch
    if pool:
        est += 2 * _phys_bytes((g_pad, row_tile), 4)     # ptT tile
        est += 2 * _phys_bytes((1, g_pad, f_out), 4)     # pooled partial output
    else:
        est += 2 * _phys_bytes((row_tile, f_out), 4)     # activation output tile
    limit = int(1.5 * est) + (8 << 20)
    limit = max(limit, 32 << 20)
    limit = min(limit, int(cfg["vmem_frac"] * cfg["vmem_cap"]))
    return limit


# --------------------------------------------------------------------------
# Forward
# --------------------------------------------------------------------------
def critic_gn_forward(x, edge_index, batch, params, num_graphs, *,
                      row_tile=None, col_tile=None):
    """Densify graph structure, then run the two K-tiled Pallas kernels."""
    x = x.astype(jnp.float32)
    n, f = x.shape
    src, dst = edge_index[0], edge_index[1]

    cfg = _tpu_config()
    tile_cap = cfg["tile_cap"]

    # --- tile selection (all multiples of 128 so every A / ptT block is lane-aligned)
    if col_tile is None:
        col_tile = min(tile_cap, _round_up(n, 128))
    col_tile = max(128, _round_up(int(col_tile), 128))
    n_pad = _round_up(n, col_tile)

    if row_tile is None:
        row_tile = min(tile_cap, n_pad)
    row_tile = max(128, min(_round_up(int(row_tile), 128), n_pad))
    while n_pad % row_tile != 0:
        row_tile -= 128
    if (cfg["prefer_even_tiles"] and row_tile % 256 == 0
            and (n_pad // row_tile) % 2 == 1):
        row_tile //= 2          # 2 TensorCores: prefer an even row-tile count
    num_row_tiles = n_pad // row_tile
    num_k_tiles = n_pad // col_tile

    hidden = params["w1_rel"].shape[1]
    out_dim = params["w2_rel"].shape[1]
    h_pad = _round_up(hidden, 128)
    d_pad = _round_up(out_dim, 128)
    g_pad = _round_up(num_graphs, 8)

    # --- fused, zero-padded weights: rows [0:kin]=W_rel, [kin:2*kin]=W_root
    w1 = jnp.zeros((2 * f, h_pad), jnp.float32)
    w1 = w1.at[:f, :hidden].set(params["w1_rel"])
    w1 = w1.at[f:, :hidden].set(params["w1_root"])
    b1 = jnp.zeros((1, h_pad), jnp.float32).at[:, :hidden].set(params["b1"])

    w2 = jnp.zeros((2 * h_pad, d_pad), jnp.float32)
    w2 = w2.at[:hidden, :out_dim].set(params["w2_rel"])
    w2 = w2.at[h_pad:h_pad + hidden, :out_dim].set(params["w2_root"])
    b2 = jnp.zeros((1, d_pad), jnp.float32).at[:, :out_dim].set(params["b2"])

    # --- dense adjacency A[i, j] = #edges j -> i, built directly in bf16
    # (exact for per-edge multiplicities <= 256; no f32 dense intermediate).
    a = (jnp.zeros((n_pad, n_pad), jnp.bfloat16)
         .at[dst, src].add(jnp.ones_like(src, dtype=jnp.bfloat16)))

    # --- pre-transposed mean-pool matrix ptT[g, i] = 1/|graph g| if batch[i]==g
    onehot = (jnp.arange(num_graphs, dtype=jnp.int32)[:, None]
              == batch[None, :].astype(jnp.int32)).astype(jnp.float32)       # (G, n)
    counts = jnp.maximum(onehot.sum(axis=1, keepdims=True), 1.0)
    ptT = jnp.zeros((g_pad, n_pad), jnp.float32).at[:num_graphs, :n].set(onehot / counts)

    x_pad = jnp.zeros((n_pad, f), jnp.float32).at[:n, :].set(x)
    x_bf16 = x_pad.astype(jnp.bfloat16)                 # aggregation feed only

    grid = (num_row_tiles, num_k_tiles)
    dims = ("parallel", "arbitrary")

    # ---- Layer 1: x1 = tanh(GraphConv1(x)) -------------------------------
    x1_pad = pl.pallas_call(
        _graphconv_kernel,
        out_shape=jax.ShapeDtypeStruct((n_pad, h_pad), jnp.float32),
        grid_spec=pltpu.PrefetchScalarGridSpec(
            num_scalar_prefetch=0,
            grid=grid,
            in_specs=[
                pl.BlockSpec((row_tile, col_tile), lambda i, k: (i, k)),   # A (bf16)
                pl.BlockSpec((col_tile, f), lambda i, k: (k, 0)),          # x K-stream (bf16)
                pl.BlockSpec((row_tile, f), lambda i, k: (i, 0)),          # x root tile (f32)
                pl.BlockSpec((2 * f, h_pad), lambda i, k: (0, 0)),         # fused W1
                pl.BlockSpec((1, h_pad), lambda i, k: (0, 0)),             # b1
            ],
            out_specs=pl.BlockSpec((row_tile, h_pad), lambda i, k: (i, 0)),
            scratch_shapes=[pltpu.VMEM((row_tile, f), jnp.float32)],
        ),
        compiler_params=pltpu.CompilerParams(
            dimension_semantics=dims,
            vmem_limit_bytes=_vmem_limit(row_tile, col_tile, f, h_pad, g_pad, cfg)),
    )(a, x_bf16, x_pad, w1, b1)

    x1_bf16 = x1_pad.astype(jnp.bfloat16)               # layer-2 aggregation feed

    # ---- Layer 2 + pooling: per-tile partial pooled sums -----------------
    partials = pl.pallas_call(
        _graphconv_pool_kernel,
        out_shape=jax.ShapeDtypeStruct((num_row_tiles, g_pad, d_pad), jnp.float32),
        grid_spec=pltpu.PrefetchScalarGridSpec(
            num_scalar_prefetch=0,
            grid=grid,
            in_specs=[
                pl.BlockSpec((row_tile, col_tile), lambda i, k: (i, k)),   # A (bf16)
                pl.BlockSpec((col_tile, h_pad), lambda i, k: (k, 0)),      # x1 K-stream (bf16)
                pl.BlockSpec((row_tile, h_pad), lambda i, k: (i, 0)),      # x1 root tile (f32)
                pl.BlockSpec((2 * h_pad, d_pad), lambda i, k: (0, 0)),     # fused W2
                pl.BlockSpec((1, d_pad), lambda i, k: (0, 0)),             # b2
                pl.BlockSpec((g_pad, row_tile), lambda i, k: (0, i)),      # ptT tile (f32)
            ],
            out_specs=pl.BlockSpec((1, g_pad, d_pad), lambda i, k: (i, 0, 0)),
            scratch_shapes=[pltpu.VMEM((row_tile, h_pad), jnp.float32)],
        ),
        compiler_params=pltpu.CompilerParams(
            dimension_semantics=dims,
            vmem_limit_bytes=_vmem_limit(row_tile, col_tile, h_pad, d_pad, g_pad,
                                         cfg, pool=True)),
    )(a, x1_bf16, x1_pad, w2, b2, ptT)

    # Partial pooled sums are already 1/|graph|-weighted -> summing gives the mean.
    pooled = partials.sum(axis=0)
    return pooled[:num_graphs, :out_dim]


# --------------------------------------------------------------------------
# Pure-JAX reference (PyTorch/PyG semantics)
# --------------------------------------------------------------------------
def _reference_forward(x, edge_index, batch, params, num_graphs):
    x = x.astype(jnp.float32)
    n = x.shape[0]
    src, dst = edge_index[0], edge_index[1]
    A = jnp.zeros((n, n), jnp.float32).at[dst, src].add(1.0)

    x1 = jnp.tanh(A @ x @ params["w1_rel"] + x @ params["w1_root"] + params["b1"])
    x2 = jnp.tanh(A @ x1 @ params["w2_rel"] + x1 @ params["w2_root"] + params["b2"])

    onehot = (batch[None, :] == jnp.arange(num_graphs)[:, None]).astype(jnp.float32)
    counts = jnp.maximum(onehot.sum(axis=1, keepdims=True), 1.0)
    return (onehot / counts) @ x2


if __name__ == "__main__":
    key = jax.random.PRNGKey(0)
    k_param, k_x = jax.random.split(key)

    n_node_features, hidden_dim, output_dim = 2, 64, 64
    nodes_per_graph, num_graphs = 100, 2
    num_nodes = nodes_per_graph * num_graphs

    params = init_params(k_param, n_node_features, hidden_dim, output_dim)

    # Two graphs of 100 nodes each, directed ring edges within each graph.
    x = jax.random.normal(k_x, (num_nodes, n_node_features), jnp.float32)
    ring = jnp.arange(nodes_per_graph, dtype=jnp.int32)
    src = jnp.concatenate([g * nodes_per_graph + ring for g in range(num_graphs)])
    dst = jnp.concatenate([g * nodes_per_graph + (ring + 1) % nodes_per_graph
                           for g in range(num_graphs)])
    edge_index = jnp.stack([src, dst], axis=0)                    # [2, E]
    batch = jnp.concatenate([jnp.full((nodes_per_graph,), g, jnp.int32)
                             for g in range(num_graphs)])

    ref = _reference_forward(x, edge_index, batch, params, num_graphs)

    # Small explicit tiles -> n_pad=256, 2 row tiles x 2 K tiles
    # (exercises the aggregation accumulator and partial-pool reduction).
    out = critic_gn_forward(x, edge_index, batch, params, num_graphs,
                            row_tile=128, col_tile=128)
    out = jax.block_until_ready(out)
    assert out.shape == (num_graphs, output_dim)
    err = float(jnp.max(jnp.abs(out - ref)))
    assert err < 2e-2, err            # bf16 aggregation feed -> ~1e-2 tolerance

    # Auto-selected (per-generation) tile sizes.
    out2 = jax.block_until_ready(
        critic_gn_forward(x, edge_index, batch, params, num_graphs))
    err2 = float(jnp.max(jnp.abs(out2 - ref)))
    assert err2 < 2e-2, err2

    print("KERNEL_OK")
</pallas_src>

<mosaic_0001>
module attributes {stable_mosaic.version = 11 : i64} {
  func.func @_graphconv_kernel(%arg0: i32, %arg1: i32, %arg2: memref<128x128xbf16, #tpu.memory_space<vmem>>, %arg3: memref<128x2xbf16, #tpu.memory_space<vmem>>, %arg4: memref<128x2xf32, #tpu.memory_space<vmem>>, %arg5: memref<4x128xf32, #tpu.memory_space<vmem>>, %arg6: memref<1x128xf32, #tpu.memory_space<vmem>>, %arg7: memref<128x128xf32, #tpu.memory_space<vmem>>, %arg8: memref<128x2xf32, #tpu.memory_space<vmem>>) attributes {dimension_semantics = [#tpu.dimension_semantics<parallel>, #tpu.dimension_semantics<arbitrary>], iteration_bounds = array<i64: 2, 2>, scalar_prefetch = 0 : i64, scratch_operands = 1 : i64, tpu.core_type = #tpu.core_type<tc>, window_params = [{transform_indices = @transform_0, window_bounds = array<i64: 128, 128>}, {transform_indices = @transform_1, window_bounds = array<i64: 128, 2>}, {transform_indices = @transform_2, window_bounds = array<i64: 128, 2>}, {pipeline_mode = #tpu.pipeline_mode<synchronous>, transform_indices = @transform_3, window_bounds = array<i64: 4, 128>}, {pipeline_mode = #tpu.pipeline_mode<synchronous>, transform_indices = @transform_4, window_bounds = array<i64: 1, 128>}, {transform_indices = @transform_5, window_bounds = array<i64: 128, 128>}]} {
    %c0_i32 = arith.constant 0 : i32
    %0 = arith.cmpi eq, %arg1, %c0_i32 : i32
    %1 = arith.extui %0 : i1 to i32
    %c0_i32_0 = arith.constant 0 : i32
    %2 = arith.cmpi ne, %1, %c0_i32_0 : i32
    scf.if %2 {
      %cst_9 = arith.constant 0.000000e+00 : f32
      %12 = vector.broadcast %cst_9 : f32 to vector<128x2xf32>
      %c0_10 = arith.constant 0 : index
      %c0_11 = arith.constant 0 : index
      %13 = vector.load %arg8[%c0_10, %c0_11] : memref<128x2xf32, #tpu.memory_space<vmem>>, vector<128x2xf32>
      tpu.vector_store %arg8[%c0_10, %c0_11], %12 {strides = array<i32>} : memref<128x2xf32, #tpu.memory_space<vmem>>, vector<128x2xf32>,
    } else {
    }
    %c0 = arith.constant 0 : index
    %c0_1 = arith.constant 0 : index
    %3 = vector.load %arg8[%c0, %c0_1] : memref<128x2xf32, #tpu.memory_space<vmem>>, vector<128x2xf32>
    %c0_2 = arith.constant 0 : index
    %c0_3 = arith.constant 0 : index
    %4 = vector.load %arg2[%c0_2, %c0_3] : memref<128x128xbf16, #tpu.memory_space<vmem>>, vector<128x128xbf16>
    %c0_4 = arith.constant 0 : index
    %c0_5 = arith.constant 0 : index
    %5 = vector.load %arg3[%c0_4, %c0_5] : memref<128x2xbf16, #tpu.memory_space<vmem>>, vector<128x2xbf16>
    %cst = arith.constant dense<0.000000e+00> : vector<128x2xf32>
    %6 = tpu.matmul %4, %5, %cst {dimension_numbers = #tpu.dot_dimension_numbers<[1], [0], [0], [1], [0, 0, 1, 1], [], []>} : vector<128x128xbf16>, vector<128x2xbf16>, vector<128x2xf32> -> vector<128x2xf32>
    %7 = arith.addf %3, %6 : vector<128x2xf32>
    %c0_6 = arith.constant 0 : index
    %c0_7 = arith.constant 0 : index
    %8 = vector.load %arg8[%c0_6, %c0_7] : memref<128x2xf32, #tpu.memory_space<vmem>>, vector<128x2xf32>
    tpu.vector_store %arg8[%c0_6, %c0_7], %7 {strides = array<i32>} : memref<128x2xf32, #tpu.memory_space<vmem>>, vector<128x2xf32>,
    %c1_i32 = arith.constant 1 : i32
    %9 = arith.cmpi eq, %arg1, %c1_i32 : i32
    %10 = arith.extui %9 : i1 to i32
    %c0_i32_8 = arith.constant 0 : i32
    %11 = arith.cmpi ne, %10, %c0_i32_8 : i32
    scf.if %11 {
      %c0_9 = arith.constant 0 : index
      %c0_10 = arith.constant 0 : index
      %12 = vector.load %arg8[%c0_9, %c0_10] : memref<128x2xf32, #tpu.memory_space<vmem>>, vector<128x2xf32>
      %c0_11 = arith.constant 0 : index
      %c0_12 = arith.constant 0 : index
      %13 = vector.load %arg5[%c0_11, %c0_12] : memref<4x128xf32, #tpu.memory_space<vmem>>, vector<2x128xf32>
      %cst_13 = arith.constant dense<0.000000e+00> : vector<128x128xf32>
      %14 = tpu.matmul %12, %13, %cst_13 {dimension_numbers = #tpu.dot_dimension_numbers<[1], [0], [0], [1], [0, 0, 1, 1], [], []>} : vector<128x2xf32>, vector<2x128xf32>, vector<128x128xf32> -> vector<128x128xf32>
      %c0_14 = arith.constant 0 : index
      %c0_15 = arith.constant 0 : index
      %15 = vector.load %arg4[%c0_14, %c0_15] : memref<128x2xf32, #tpu.memory_space<vmem>>, vector<128x2xf32>
      %c2 = arith.constant 2 : index
      %c0_16 = arith.constant 0 : index
      %16 = vector.load %arg5[%c2, %c0_16] : memref<4x128xf32, #tpu.memory_space<vmem>>, vector<2x128xf32>
      %cst_17 = arith.constant dense<0.000000e+00> : vector<128x128xf32>
      %17 = tpu.matmul %15, %16, %cst_17 {dimension_numbers = #tpu.dot_dimension_numbers<[1], [0], [0], [1], [0, 0, 1, 1], [], []>} : vector<128x2xf32>, vector<2x128xf32>, vector<128x128xf32> -> vector<128x128xf32>
      %18 = arith.addf %14, %17 : vector<128x128xf32>
      %c0_18 = arith.constant 0 : index
      %c0_19 = arith.constant 0 : index
      %19 = vector.load %arg6[%c0_18, %c0_19] : memref<1x128xf32, #tpu.memory_space<vmem>>, vector<1x128xf32>
      %20 = vector.broadcast %19 : vector<1x128xf32> to vector<128x128xf32>
      %21 = arith.addf %18, %20 : vector<128x128xf32>
      %22 = math.tanh %21 : vector<128x128xf32>
      %c0_20 = arith.constant 0 : index
      %c0_21 = arith.constant 0 : index
      %23 = vector.load %arg7[%c0_20, %c0_21] : memref<128x128xf32, #tpu.memory_space<vmem>>, vector<128x128xf32>
      tpu.vector_store %arg7[%c0_20, %c0_21], %22 {strides = array<i32>} : memref<128x128xf32, #tpu.memory_space<vmem>>, vector<128x128xf32>,
    } else {
    }
    return
  }
  func.func @transform_0(%arg0: i32, %arg1: i32) -> (i32, i32) {
    %c0_i32 = arith.constant 0 : i32
    return %arg0, %arg1 : i32, i32
  }
  func.func @transform_1(%arg0: i32, %arg1: i32) -> (i32, i32) {
    %c0_i32 = arith.constant 0 : i32
    %c0_i32_0 = arith.constant 0 : i32
    return %arg1, %c0_i32 : i32, i32
  }
  func.func @transform_2(%arg0: i32, %arg1: i32) -> (i32, i32) {
    %c0_i32 = arith.constant 0 : i32
    %c0_i32_0 = arith.constant 0 : i32
    return %arg0, %c0_i32 : i32, i32
  }
  func.func @transform_3(%arg0: i32, %arg1: i32) -> (i32, i32) {
    %c0_i32 = arith.constant 0 : i32
    %c0_i32_0 = arith.constant 0 : i32
    %c0_i32_1 = arith.constant 0 : i32
    return %c0_i32, %c0_i32_0 : i32, i32
  }
  func.func @transform_4(%arg0: i32, %arg1: i32) -> (i32, i32) {
    %c0_i32 = arith.constant 0 : i32
    %c0_i32_0 = arith.constant 0 : i32
    %c0_i32_1 = arith.constant 0 : i32
    return %c0_i32, %c0_i32_0 : i32, i32
  }
  func.func @transform_5(%arg0: i32, %arg1: i32) -> (i32, i32) {
    %c0_i32 = arith.constant 0 : i32
    %c0_i32_0 = arith.constant 0 : i32
    return %arg0, %c0_i32 : i32, i32
  }
}

</mosaic_0001>

<llo_original>
// kernel: tpu_custom_call.1
$region0: #{tpu_custom_call.1}
  #allocation0 [shape = 'u32[]', space=smem, size = 0x4, offset = 0x4, fixed_abs, tag = 'smem constant byte address 0x4 - core index']
  #allocation1 [shape = 'u32[144,128]{1,0:T(1,128)}', space=vmem, size = 0x12000, scoped, tag = 'internal scratch']
  #allocation2 [shape = 'f32[128,2]{1,0:T(8,128)}', space=vmem, size = 0x10000, scoped, tag = 'scratch operand']
  %s0 = inlined_call_operand.vmem [shape: bf16[256,256], index: 0, kind: input, shape index: {}]
  %s1 = inlined_call_operand.vmem [shape: bf16[256,2], index: 1, kind: input, shape index: {}]
  %s2 = inlined_call_operand.vmem [shape: f32[256,2], index: 2, kind: input, shape index: {}]
  %s3 = inlined_call_operand.vmem [shape: f32[4,128], index: 3, kind: input, shape index: {}]
  %s4 = inlined_call_operand.vmem [shape: f32[1,128], index: 4, kind: input, shape index: {}]
  %s5 = inlined_call_operand.hbm [shape: f32[256,128], index: 5, kind: output, shape index: {}]
  %s6 = sld [smem:[#allocation0]]
  $region102: #{tpu_custom_call.1} parent=0
    _
  %s8 = ssub.s32 1, %s6
  %s9 = scalar_select 0, %s8, %s6
  $region1: #{tpu_custom_call.1} parent=0
    #allocation3 [shape = 'u8[65536]{0}', space=vmem, size = 0x10000, scoped, tag = 'input window, operand 0']
    #allocation4 [shape = 'u8[131072]{0}', space=vmem, size = 0x20000, scoped, tag = 'output window, operand 0']
    #allocation5 [shape = 's32[2]{0}', space=sflag, size = 0x8, scoped, tag = 'scoped memory for tpu_custom_call.1']
    %10 = vsyncpa [#allocation5], 0
    %s11 = scalar_lea.sflag [#allocation5], 1
    %12 = vsyncpa %s11, 0
    loop: start=0, step=1, limit=6
    $region2: #{tpu_custom_call.1} parent=1 // loop_pre_header
      _
    $region3: #{tpu_custom_call.1} parent=1 // loop_header
      %s14 = sphi 0, %s18
      %p15 = scmp.ge.s32.totalorder %s14, 6
      %s21 = sphi 0, %s33
      %s22 = sphi 0, %s29
      %s23 = sphi 0, %s21
      %s24 = sphi 0, %s22
      %s25 = sphi 0, %s23
      %s26 = sphi 0, %s24
      %s38 = sphi 0, %s40
      %s41 = sphi 0, %s38
      %s42 = sphi 0, %s41
      %s58 = sphi 0, %s42
      %s64 = sphi 0, %s66
      %s67 = sphi 0, %s64
      %s68 = sphi 0, %s67
      %s84 = sphi 0, %s68
      %s90 = sphi 0, %s92
      %s93 = sphi 0, %s90
      %s94 = sphi 0, %s93
      %s110 = sphi 0, %s94
      %s114 = sphi 0, %s114
      %s116 = sphi 0, %s114
      %s117 = sphi 0, %s116
      %s131 = sphi 0, %s117
      %s135 = sphi 0, %s135
      %s137 = sphi 0, %s135
      %s138 = sphi 0, %s137
      %s152 = sphi 0, %s138
      %s158 = sphi 0, %s160
      %s161 = sphi 0, %s158
      %s162 = sphi 0, %s161
      %s178 = sphi 0, %s162
    $region4: #{tpu_custom_call.1} parent=1 // loop_header_branch
      %17 = sbr.rel (%p15) target = $region8
    $region5: #{tpu_custom_call.1} parent=1 // loop_body
      %s19 = ssub.s32 %s14, 1
      %s20 = ssub.s32 %s14, 2
      %s27 = sadd.s32 1, %s22
      %p28 = scmp.ge.s32.totalorder %s27, 2
      %s29 = scalar_select %p28, 0, %s27
      %s30 = sadd.s32 1, %s21
      %s31 = scalar_select %p28, %s30, %s21
      %p32 = scmp.ge.s32.totalorder %s31, 2
      %s33 = scalar_select %p32, 0, %s31
      %s34 = ssub.s32 %s21, %s33
      %s35 = ssub.s32 %s22, %s29
      %s36 = sor.u32 %s34, %s35
      %p37 = scmp.eq.s32.totalorder %s36, 0
      %s39 = sadd.s32 %s38, 1
      %s40 = scalar_select %p37, %s38, %s39
      %p43 = pneg %p37
      %p44 = scmp.eq.s32.totalorder %s14, 3
      %p45 = por %p43, %p44
      %p46 = scmp.ne.s32.totalorder %s38, %s41
      %p47 = scmp.eq.s32.totalorder %s14, 0
      %p48 = por %p46, %p47
      %p49 = scmp.ne.s32.totalorder %s38, %s41
      %p50 = scmp.eq.s32.totalorder %s19, 3
      %p51 = por %p49, %p50
      %p52 = scmp.ne.s32.totalorder %s41, %s42
      %p53 = scmp.eq.s32.totalorder %s19, 0
      %p54 = por %p52, %p53
      %p55 = scmp.ne.s32.totalorder %s41, %s42
      %p56 = scmp.eq.s32.totalorder %s20, 3
      %p57 = por %p55, %p56
      %p59 = scmp.ne.s32.totalorder %s42, %s58
      %p60 = scmp.eq.s32.totalorder %s20, 0
      %p61 = por %p59, %p60
      %s62 = ssub.s32 %s22, %s29
      %p63 = scmp.eq.s32.totalorder %s62, 0
      %s65 = sadd.s32 %s64, 1
      %s66 = scalar_select %p63, %s64, %s65
      %p69 = pneg %p63
      %p70 = scmp.eq.s32.totalorder %s14, 3
      %p71 = por %p69, %p70
      %p72 = scmp.ne.s32.totalorder %s64, %s67
      %p73 = scmp.eq.s32.totalorder %s14, 0
      %p74 = por %p72, %p73
      %p75 = scmp.ne.s32.totalorder %s64, %s67
      %p76 = scmp.eq.s32.totalorder %s19, 3
      %p77 = por %p75, %p76
      %p78 = scmp.ne.s32.totalorder %s67, %s68
      %p79 = scmp.eq.s32.totalorder %s19, 0
      %p80 = por %p78, %p79
      %p81 = scmp.ne.s32.totalorder %s67, %s68
      %p82 = scmp.eq.s32.totalorder %s20, 3
      %p83 = por %p81, %p82
      %p85 = scmp.ne.s32.totalorder %s68, %s84
      %p86 = scmp.eq.s32.totalorder %s20, 0
      %p87 = por %p85, %p86
      %s88 = ssub.s32 %s21, %s33
      %p89 = scmp.eq.s32.totalorder %s88, 0
      %s91 = sadd.s32 %s90, 1
      %s92 = scalar_select %p89, %s90, %s91
      %p95 = pneg %p89
      %p96 = scmp.eq.s32.totalorder %s14, 3
      %p97 = por %p95, %p96
      %p98 = scmp.ne.s32.totalorder %s90, %s93
      %p99 = scmp.eq.s32.totalorder %s14, 0
      %p100 = por %p98, %p99
      %p101 = scmp.ne.s32.totalorder %s90, %s93
      %p102 = scmp.eq.s32.totalorder %s19, 3
      %p103 = por %p101, %p102
      %p104 = scmp.ne.s32.totalorder %s93, %s94
      %p105 = scmp.eq.s32.totalorder %s19, 0
      %p106 = por %p104, %p105
      %p107 = scmp.ne.s32.totalorder %s93, %s94
      %p108 = scmp.eq.s32.totalorder %s20, 3
      %p109 = por %p107, %p108
      %p111 = scmp.ne.s32.totalorder %s94, %s110
      %p112 = scmp.eq.s32.totalorder %s20, 0
      %p113 = por %p111, %p112
      %s115 = sadd.s32 %s114, 1
      %p118 = scmp.eq.s32.totalorder %s14, 3
      %p119 = scmp.ne.s32.totalorder %s114, %s116
      %p120 = scmp.eq.s32.totalorder %s14, 0
      %p121 = por %p119, %p120
      %p122 = scmp.ne.s32.totalorder %s114, %s116
      %p123 = scmp.eq.s32.totalorder %s19, 3
      %p124 = por %p122, %p123
      %p125 = scmp.ne.s32.totalorder %s116, %s117
      %p126 = scmp.eq.s32.totalorder %s19, 0
      %p127 = por %p125, %p126
      %p128 = scmp.ne.s32.totalorder %s116, %s117
      %p129 = scmp.eq.s32.totalorder %s20, 3
      %p130 = por %p128, %p129
      %p132 = scmp.ne.s32.totalorder %s117, %s131
      %p133 = scmp.eq.s32.totalorder %s20, 0
      %p134 = por %p132, %p133
      %s136 = sadd.s32 %s135, 1
      %p139 = scmp.eq.s32.totalorder %s14, 3
      %p140 = scmp.ne.s32.totalorder %s135, %s137
      %p141 = scmp.eq.s32.totalorder %s14, 0
      %p142 = por %p140, %p141
      %p143 = scmp.ne.s32.totalorder %s135, %s137
      %p144 = scmp.eq.s32.totalorder %s19, 3
      %p145 = por %p143, %p144
      %p146 = scmp.ne.s32.totalorder %s137, %s138
      %p147 = scmp.eq.s32.totalorder %s19, 0
      %p148 = por %p146, %p147
      %p149 = scmp.ne.s32.totalorder %s137, %s138
      %p150 = scmp.eq.s32.totalorder %s20, 3
      %p151 = por %p149, %p150
      %p153 = scmp.ne.s32.totalorder %s138, %s152
      %p154 = scmp.eq.s32.totalorder %s20, 0
      %p155 = por %p153, %p154
      %s156 = ssub.s32 %s21, %s33
      %p157 = scmp.eq.s32.totalorder %s156, 0
      %s159 = sadd.s32 %s158, 1
      %s160 = scalar_select %p157, %s158, %s159
      %p163 = pneg %p157
      %p164 = scmp.eq.s32.totalorder %s14, 3
      %p165 = por %p163, %p164
      %p166 = scmp.ne.s32.totalorder %s158, %s161
      %p167 = scmp.eq.s32.totalorder %s14, 0
      %p168 = por %p166, %p167
      %p169 = scmp.ne.s32.totalorder %s158, %s161
      %p170 = scmp.eq.s32.totalorder %s19, 3
      %p171 = por %p169, %p170
      %p172 = scmp.ne.s32.totalorder %s161, %s162
      %p173 = scmp.eq.s32.totalorder %s19, 0
      %p174 = por %p172, %p173
      %p175 = scmp.ne.s32.totalorder %s161, %s162
      %p176 = scmp.eq.s32.totalorder %s20, 3
      %p177 = por %p175, %p176
      %p179 = scmp.ne.s32.totalorder %s162, %s178
      %p180 = scmp.eq.s32.totalorder %s20, 0
      %p181 = por %p179, %p180
      %p182 = scmp.le.s32.totalorder 1, %s14
      %p183 = scmp.lt.s32.totalorder %s14, 5
      %p184 = pnand %p182, %p183
      %p185 = pneg %p184
      // Predicated region
      $region9: #{tpu_custom_call.1} parent=5 // pred_check
        _
      $region10: #{tpu_custom_call.1} parent=5 // pred_check_branch
        %187 = sbr.rel (%p184) target = $region12
      $region11: #{tpu_custom_call.1} parent=5 // pred_region
        %s188 = ssub.s32 %s14, 1
        // Predicated region
        $region13: #{tpu_custom_call.1} parent=11 // pred_check
          %p189 = pneg %p127
        $region14: #{tpu_custom_call.1} parent=11 // pred_check_branch
          %191 = sbr.rel (%p189) target = $region16
        $region15: #{tpu_custom_call.1} parent=11 // pred_region
          _
        $region16: #{tpu_custom_call.1} parent=11 // pred_fallthru
          _
        // Predicated region
        $region17: #{tpu_custom_call.1} parent=11 // pred_check
          %p192 = pneg %p148
        $region18: #{tpu_custom_call.1} parent=11 // pred_check_branch
          %194 = sbr.rel (%p192) target = $region20
        $region19: #{tpu_custom_call.1} parent=11 // pred_region
          _
        $region20: #{tpu_custom_call.1} parent=11 // pred_fallthru
          _
      $region12: #{tpu_custom_call.1} parent=5 // pred_fallthru
        _
      %p195 = scmp.lt.s32.totalorder %s14, 4
      // Predicated region
      $region21: #{tpu_custom_call.1} parent=5 // pred_check
        %p196 = pneg %p195
      $region22: #{tpu_custom_call.1} parent=5 // pred_check_branch
        %198 = sbr.rel (%p196) target = $region24
      $region23: #{tpu_custom_call.1} parent=5 // pred_region
        // Predicated region
        $region25: #{tpu_custom_call.1} parent=23 // pred_check
          %p199 = pneg %p48
        $region26: #{tpu_custom_call.1} parent=23 // pred_check_branch
          %201 = sbr.rel (%p199) target = $region28
        $region27: #{tpu_custom_call.1} parent=23 // pred_region
          %s202 = sand.u32 %s38, 1
          %s203 = sand.u32 %s38, 1
          %s204 = smul.addr %s203, 64
          %s205 = scalar_lea.vmem [#allocation3], %s204
          %s206 = smul.u32 16, %s21
          %s207 = smul.addr %s206, 2
          %s208 = sadd.s32 %s22, %s207
          %s209 = smul.addr %s208, 4
          %s210 = scalar_lea.vmem %s0, %s209
          // Predicated region
          $region29: #{tpu_custom_call.1} parent=27 // pred_check
            _
          $region30: #{tpu_custom_call.1} parent=27 // pred_check_branch
            %212 = sbr.rel (0) target = $region32
          $region31: #{tpu_custom_call.1} parent=27 // pred_region
            // Predicated region
            $region33: #{tpu_custom_call.1} parent=31 // pred_check
              _
            $region34: #{tpu_custom_call.1} parent=31 // pred_check_branch
              %214 = sbr.rel target = $region36
            $region35: #{tpu_custom_call.1} parent=31 // pred_region
              // Predicated region
              $region48: #{tpu_custom_call.1} parent=35 // pred_check
                _
              $region49: #{tpu_custom_call.1} parent=35 // pred_check_branch
                %259 = sbr.rel (0) target = $region51
              $region50: #{tpu_custom_call.1} parent=35 // pred_region
                loop: start=0, step=1, limit=1
                $region52: #{tpu_custom_call.1} parent=50 // loop_pre_header
                  _
                $region53: #{tpu_custom_call.1} parent=50 // loop_header
                  %s261 = sphi 0, %s265
                  %p262 = scmp.ge.s32.totalorder %s261, 1
                  %s266 = sphi %s210, %s210
                  %s267 = sphi %s205, %s205
                $region54: #{tpu_custom_call.1} parent=50 // loop_header_branch
                  %264 = sbr.rel (%p262) target = $region58
                $region55: #{tpu_custom_call.1} parent=50 // loop_body
                  _
                $region56: #{tpu_custom_call.1} parent=50 // loop_footer
                  %s265 = sadd.s32 1, %s261
                $region57: #{tpu_custom_call.1} parent=50 // loop_footer_branch
                  %260 = sbr.rel target = $region53
                $region58: #{tpu_custom_call.1} parent=50 // loop_exit
                  _
                loop: start=0, step=1, limit=1
                $region59: #{tpu_custom_call.1} parent=50 // loop_pre_header
                  _
                $region60: #{tpu_custom_call.1} parent=50 // loop_header
                  %s270 = sphi 0, %s274
                  %p271 = scmp.ge.s32.totalorder %s270, 1
                  %s275 = sphi %s210, %s210
                  %s276 = sphi %s205, %s205
                $region61: #{tpu_custom_call.1} parent=50 // loop_header_branch
                  %273 = sbr.rel (%p271) target = $region65
                $region62: #{tpu_custom_call.1} parent=50 // loop_body
                  %v277 = vld [vmem:[%s275] sm:$0xf]
                  %278 = vst [vmem:[%s276] sm:$0xf] %v277
                  %v279 = vld [vmem:[%s275 + $0x8] sm:$0xf]
                  %280 = vst [vmem:[%s276 + $0x4] sm:$0xf] %v279
                  %v281 = vld [vmem:[%s275 + $0x10] sm:$0xf]
                  %282 = vst [vmem:[%s276 + $0x8] sm:$0xf] %v281
                  %v283 = vld [vmem:[%s275 + $0x18] sm:$0xf]
                  %284 = vst [vmem:[%s276 + $0xc] sm:$0xf] %v283
                  %v285 = vld [vmem:[%s275 + $0x20] sm:$0xf]
                  %286 = vst [vmem:[%s276 + $0x10] sm:$0xf] %v285
                  %v287 = vld [vmem:[%s275 + $0x28] sm:$0xf]
                  %288 = vst [vmem:[%s276 + $0x14] sm:$0xf] %v287
                  %v289 = vld [vmem:[%s275 + $0x30] sm:$0xf]
                  %290 = vst [vmem:[%s276 + $0x18] sm:$0xf] %v289
                  %v291 = vld [vmem:[%s275 + $0x38] sm:$0xf]
                  %292 = vst [vmem:[%s276 + $0x1c] sm:$0xf] %v291
                  %v293 = vld [vmem:[%s275 + $0x40] sm:$0xf]
                  %294 = vst [vmem:[%s276 + $0x20] sm:$0xf] %v293
                  %v295 = vld [vmem:[%s275 + $0x48] sm:$0xf]
                  %296 = vst [vmem:[%s276 + $0x24] sm:$0xf] %v295
                  %v297 = vld [vmem:[%s275 + $0x50] sm:$0xf]
                  %298 = vst [vmem:[%s276 + $0x28] sm:$0xf] %v297
                  %v299 = vld [vmem:[%s275 + $0x58] sm:$0xf]
                  %300 = vst [vmem:[%s276 + $0x2c] sm:$0xf] %v299
                  %v301 = vld [vmem:[%s275 + $0x60] sm:$0xf]
                  %302 = vst [vmem:[%s276 + $0x30] sm:$0xf] %v301
                  %v303 = vld [vmem:[%s275 + $0x68] sm:$0xf]
                  %304 = vst [vmem:[%s276 + $0x34] sm:$0xf] %v303
                  %v305 = vld [vmem:[%s275 + $0x70] sm:$0xf]
                  %306 = vst [vmem:[%s276 + $0x38] sm:$0xf] %v305
                  %v307 = vld [vmem:[%s275 + $0x78] sm:$0xf]
                  %308 = vst [vmem:[%s276 + $0x3c] sm:$0xf] %v307
                $region63: #{tpu_custom_call.1} parent=50 // loop_footer
                  %s274 = sadd.s32 1, %s270
                $region64: #{tpu_custom_call.1} parent=50 // loop_footer_branch
                  %269 = sbr.rel target = $region60
                $region65: #{tpu_custom_call.1} parent=50 // loop_exit
                  _
              $region51: #{tpu_custom_call.1} parent=35 // pred_fallthru
                _
            $region36: #{tpu_custom_call.1} parent=31 // pred_fallthru
              _
            // Predicated region
            $region37: #{tpu_custom_call.1} parent=31 // pred_check
              _
            $region38: #{tpu_custom_call.1} parent=31 // pred_check_branch
              %216 = sbr.rel (0) target = $region40
            $region39: #{tpu_custom_call.1} parent=31 // pred_region
              loop: start=0, step=1, limit=1
              $region41: #{tpu_custom_call.1} parent=39 // loop_pre_header
                _
              $region42: #{tpu_custom_call.1} parent=39 // loop_header
                %s219 = sphi 0, %s223
                %p220 = scmp.ge.s32.totalorder %s219, 1
                %s224 = sphi %s210, %s210
                %s225 = sphi %s205, %s205
              $region43: #{tpu_custom_call.1} parent=39 // loop_header_branch
                %222 = sbr.rel (%p220) target = $region47
              $region44: #{tpu_custom_call.1} parent=39 // loop_body
                %v226 = vld [vmem:[%s224] sm:$0xf]
                %227 = vst [vmem:[%s225] sm:$0xf] %v226
                %v228 = vld [vmem:[%s224 + $0x8] sm:$0xf]
                %229 = vst [vmem:[%s225 + $0x4] sm:$0xf] %v228
                %v230 = vld [vmem:[%s224 + $0x10] sm:$0xf]
                %231 = vst [vmem:[%s225 + $0x8] sm:$0xf] %v230
                %v232 = vld [vmem:[%s224 + $0x18] sm:$0xf]
                %233 = vst [vmem:[%s225 + $0xc] sm:$0xf] %v232
                %v234 = vld [vmem:[%s224 + $0x20] sm:$0xf]
                %235 = vst [vmem:[%s225 + $0x10] sm:$0xf] %v234
                %v236 = vld [vmem:[%s224 + $0x28] sm:$0xf]
                %237 = vst [vmem:[%s225 + $0x14] sm:$0xf] %v236
                %v238 = vld [vmem:[%s224 + $0x30] sm:$0xf]
                %239 = vst [vmem:[%s225 + $0x18] sm:$0xf] %v238
                %v240 = vld [vmem:[%s224 + $0x38] sm:$0xf]
                %241 = vst [vmem:[%s225 + $0x1c] sm:$0xf] %v240
                %v242 = vld [vmem:[%s224 + $0x40] sm:$0xf]
                %243 = vst [vmem:[%s225 + $0x20] sm:$0xf] %v242
                %v244 = vld [vmem:[%s224 + $0x48] sm:$0xf]
                %245 = vst [vmem:[%s225 + $0x24] sm:$0xf] %v244
                %v246 = vld [vmem:[%s224 + $0x50] sm:$0xf]
                %247 = vst [vmem:[%s225 + $0x28] sm:$0xf] %v246
                %v248 = vld [vmem:[%s224 + $0x58] sm:$0xf]
                %249 = vst [vmem:[%s225 + $0x2c] sm:$0xf] %v248
                %v250 = vld [vmem:[%s224 + $0x60] sm:$0xf]
                %251 = vst [vmem:[%s225 + $0x30] sm:$0xf] %v250
                %v252 = vld [vmem:[%s224 + $0x68] sm:$0xf]
                %253 = vst [vmem:[%s225 + $0x34] sm:$0xf] %v252
                %v254 = vld [vmem:[%s224 + $0x70] sm:$0xf]
                %255 = vst [vmem:[%s225 + $0x38] sm:$0xf] %v254
                %v256 = vld [vmem:[%s224 + $0x78] sm:$0xf]
                %257 = vst [vmem:[%s225 + $0x3c] sm:$0xf] %v256
              $region45: #{tpu_custom_call.1} parent=39 // loop_footer
                %s223 = sadd.s32 1, %s219
              $region46: #{tpu_custom_call.1} parent=39 // loop_footer_branch
                %218 = sbr.rel target = $region42
              $region47: #{tpu_custom_call.1} parent=39 // loop_exit
                _
            $region40: #{tpu_custom_call.1} parent=31 // pred_fallthru
              _
          $region32: #{tpu_custom_call.1} parent=27 // pred_fallthru
            _
          %309 = vnop
        $region28: #{tpu_custom_call.1} parent=23 // pred_fallthru
          _
        // Predicated region
        $region66: #{tpu_custom_call.1} parent=23 // pred_check
          %p310 = pneg %p74
        $region67: #{tpu_custom_call.1} parent=23 // pred_check_branch
          %312 = sbr.rel (%p310) target = $region69
        $region68: #{tpu_custom_call.1} parent=23 // pred_region
          %s313 = smul.u32 16, %s22
          %p314 = scmp.lt.s32.totalorder %s313, 31
          %s315 = scalar_select %p314, %s313, 31
          %s316 = smul.addr %s315, 4
          %s317 = scalar_lea.vmem %s1, %s316
          %s318 = smul.u32 16, %s22
        $region69: #{tpu_custom_call.1} parent=23 // pred_fallthru
          _
        // Predicated region
        $region70: #{tpu_custom_call.1} parent=23 // pred_check
          %p319 = pneg %p100
        $region71: #{tpu_custom_call.1} parent=23 // pred_check_branch
          %321 = sbr.rel (%p319) target = $region73
        $region72: #{tpu_custom_call.1} parent=23 // pred_region
          %s322 = smul.u32 16, %s21
          %p323 = scmp.lt.s32.totalorder %s322, 31
          %s324 = scalar_select %p323, %s322, 31
          %s325 = smul.addr %s324, 8
          %s326 = scalar_lea.vmem %s2, %s325
          %s327 = smul.u32 16, %s21
        $region73: #{tpu_custom_call.1} parent=23 // pred_fallthru
          _
      $region24: #{tpu_custom_call.1} parent=5 // pred_fallthru
        _
      %p328 = scmp.le.s32.totalorder 1, %s14
      %p329 = scmp.lt.s32.totalorder %s14, 5
      %p330 = pnand %p328, %p329
      %p331 = pneg %p330
      // Predicated region
      $region74: #{tpu_custom_call.1} parent=5 // pred_check
        _
      $region75: #{tpu_custom_call.1} parent=5 // pred_check_branch
        %333 = sbr.rel (%p330) target = $region77
      $region76: #{tpu_custom_call.1} parent=5 // pred_region
        %s334 = ssub.s32 %s14, 1
        %s335 = sand.u32 %s41, 1
        %s336 = sand.u32 %s41, 1
        %s337 = smul.addr %s336, 64
        %s338 = scalar_lea.vmem [#allocation3], %s337
        // Predicated region
        $region78: #{tpu_custom_call.1} parent=76 // pred_check
          %p339 = pneg %p54
        $region79: #{tpu_custom_call.1} parent=76 // pred_check_branch
          %341 = sbr.rel (%p339) target = $region81
        $region80: #{tpu_custom_call.1} parent=76 // pred_region
          _
        $region81: #{tpu_custom_call.1} parent=76 // pred_fallthru
          _
        %s342 = sand.u32 %s41, 1
        %s343 = sand.u32 %s41, 1
        %s344 = smul.addr %s343, 64
        %s345 = scalar_lea.vmem [#allocation3], %s344
        %p346 = pneg %p54
        %p347 = pneg %p51
        %s348 = smul.u32 16, %s24
        %p349 = scmp.lt.s32.totalorder %s348, 31
        %s350 = scalar_select %p349, %s348, 31
        %s351 = smul.addr %s350, 4
        %s352 = scalar_lea.vmem %s1, %s351
        %p353 = pneg %p80
        %p354 = pneg %p77
        %s355 = smul.u32 16, %s23
        %p356 = scmp.lt.s32.totalorder %s355, 31
        %s357 = scalar_select %p356, %s355, 31
        %s358 = smul.addr %s357, 8
        %s359 = scalar_lea.vmem %s2, %s358
        %p360 = pneg %p106
        %p361 = pneg %p103
        %p362 = pneg %p127
        %p363 = pneg %p124
        %p364 = pneg %p148
        %p365 = pneg %p145
        %p366 = pneg %p174
        %p367 = pneg %p171
        %s368 = sand.u32 %s161, 1
        %s369 = scalar_lea.sflag [#allocation5], %s368
        %s370 = sand.u32 %s161, 1
        %s371 = smul.addr %s370, 128
        %s372 = scalar_lea.vmem [#allocation4], %s371
        %s373 = smul.u32 16, %s23
        %s374 = smul.u32 16, %s24
        %p375 = scmp.lt.s32.totalorder %s374, 31
        %s376 = scalar_select %p375, %s374, 31
        %s377 = smul.addr %s376, 4
        %s378 = scalar_lea.vmem %s1, %s377
        %s379 = smul.u32 16, %s24
        %s380 = smul.u32 16, %s23
        %p381 = scmp.lt.s32.totalorder %s380, 31
        %s382 = scalar_select %p381, %s380, 31
        %s383 = smul.addr %s382, 8
        %s384 = scalar_lea.vmem %s2, %s383
        %s385 = smul.u32 16, %s23
        %s386 = smul.u32 16, %s23
        %p388 = scmp.eq.s32.totalorder %s24, 0
        // Predicated region
        $region82: #{tpu_custom_call.1} parent=76 // pred_check
          %p389 = pneg %p388
        $region83: #{tpu_custom_call.1} parent=76 // pred_check_branch
          %391 = sbr.rel (%p389) target = $region85
        $region84: #{tpu_custom_call.1} parent=76 // pred_region
          %vm392 = vcmask 15360
          %393 = vst.msk [vmem:[#allocation2] sm:$0xff] %vm392, 0.0
          %394 = vst.msk [vmem:[#allocation2 + $0x8] sm:$0xff] %vm392, 0.0
          %395 = vst.msk [vmem:[#allocation2 + $0x10] sm:$0xff] %vm392, 0.0
          %396 = vst.msk [vmem:[#allocation2 + $0x18] sm:$0xff] %vm392, 0.0
          %397 = vst.msk [vmem:[#allocation2 + $0x20] sm:$0xff] %vm392, 0.0
          %398 = vst.msk [vmem:[#allocation2 + $0x28] sm:$0xff] %vm392, 0.0
          %399 = vst.msk [vmem:[#allocation2 + $0x30] sm:$0xff] %vm392, 0.0
          %400 = vst.msk [vmem:[#allocation2 + $0x38] sm:$0xff] %vm392, 0.0
          %401 = vst.msk [vmem:[#allocation2 + $0x40] sm:$0xff] %vm392, 0.0
          %402 = vst.msk [vmem:[#allocation2 + $0x48] sm:$0xff] %vm392, 0.0
          %403 = vst.msk [vmem:[#allocation2 + $0x50] sm:$0xff] %vm392, 0.0
          %404 = vst.msk [vmem:[#allocation2 + $0x58] sm:$0xff] %vm392, 0.0
          %405 = vst.msk [vmem:[#allocation2 + $0x60] sm:$0xff] %vm392, 0.0
          %406 = vst.msk [vmem:[#allocation2 + $0x68] sm:$0xff] %vm392, 0.0
          %407 = vst.msk [vmem:[#allocation2 + $0x70] sm:$0xff] %vm392, 0.0
          %408 = vst.msk [vmem:[#allocation2 + $0x78] sm:$0xff] %vm392, 0.0
        $region85: #{tpu_custom_call.1} parent=76 // pred_fallthru
          _
        %v409 = vld [vmem:[#allocation2] sm:$0xff]
        %v410 = vld [vmem:[#allocation2 + $0x8] sm:$0xff]
        %v411 = vld [vmem:[#allocation2 + $0x10] sm:$0xff]
        %v412 = vld [vmem:[#allocation2 + $0x18] sm:$0xff]
        %v413 = vld [vmem:[#allocation2 + $0x20] sm:$0xff]
        %v414 = vld [vmem:[#allocation2 + $0x28] sm:$0xff]
        %v415 = vld [vmem:[#allocation2 + $0x30] sm:$0xff]
        %v416 = vld [vmem:[#allocation2 + $0x38] sm:$0xff]
        %v417 = vld [vmem:[#allocation2 + $0x40] sm:$0xff]
        %v418 = vld [vmem:[#allocation2 + $0x48] sm:$0xff]
        %v419 = vld [vmem:[#allocation2 + $0x50] sm:$0xff]
        %v420 = vld [vmem:[#allocation2 + $0x58] sm:$0xff]
        %v421 = vld [vmem:[#allocation2 + $0x60] sm:$0xff]
        %v422 = vld [vmem:[#allocation2 + $0x68] sm:$0xff]
        %v423 = vld [vmem:[#allocation2 + $0x70] sm:$0xff]
        %v424 = vld [vmem:[#allocation2 + $0x78] sm:$0xff]
        %v425 = vld [vmem:[%s338] sm:$0xf]
        %v426 = vld [vmem:[%s338 + $0x4] sm:$0xf]
        %v427 = vld [vmem:[%s338 + $0x8] sm:$0xf]
        %v428 = vld [vmem:[%s338 + $0xc] sm:$0xf]
        %v429 = vld [vmem:[%s338 + $0x10] sm:$0xf]
        %v430 = vld [vmem:[%s338 + $0x14] sm:$0xf]
        %v431 = vld [vmem:[%s338 + $0x18] sm:$0xf]
        %v432 = vld [vmem:[%s338 + $0x1c] sm:$0xf]
        %v433 = vld [vmem:[%s338 + $0x20] sm:$0xf]
        %v434 = vld [vmem:[%s338 + $0x24] sm:$0xf]
        %v435 = vld [vmem:[%s338 + $0x28] sm:$0xf]
        %v436 = vld [vmem:[%s338 + $0x2c] sm:$0xf]
        %v437 = vld [vmem:[%s338 + $0x30] sm:$0xf]
        %v438 = vld [vmem:[%s338 + $0x34] sm:$0xf]
        %v439 = vld [vmem:[%s338 + $0x38] sm:$0xf]
        %v440 = vld [vmem:[%s338 + $0x3c] sm:$0xf]
        %v441 = vld [vmem:[%s378] sm:$0xf]
        %v442 = vld [vmem:[%s378 + $0x4] sm:$0xf]
        %v443 = vld [vmem:[%s378 + $0x8] sm:$0xf]
        %v444 = vld [vmem:[%s378 + $0xc] sm:$0xf]
        %v445 = vld [vmem:[%s378 + $0x10] sm:$0xf]
        %v446 = vld [vmem:[%s378 + $0x14] sm:$0xf]
        %v447 = vld [vmem:[%s378 + $0x18] sm:$0xf]
        %v448 = vld [vmem:[%s378 + $0x1c] sm:$0xf]
        %v449 = vld [vmem:[%s378 + $0x20] sm:$0xf]
        %v450 = vld [vmem:[%s378 + $0x24] sm:$0xf]
        %v451 = vld [vmem:[%s378 + $0x28] sm:$0xf]
        %v452 = vld [vmem:[%s378 + $0x2c] sm:$0xf]
        %v453 = vld [vmem:[%s378 + $0x30] sm:$0xf]
        %v454 = vld [vmem:[%s378 + $0x34] sm:$0xf]
        %v455 = vld [vmem:[%s378 + $0x38] sm:$0xf]
        %v456 = vld [vmem:[%s378 + $0x3c] sm:$0xf]
        %v473 = vunpack.c.l.b16 %v425
        %v474 = vunpack.c.l.b16 %v426
        %v475 = vunpack.c.l.b16 %v427
        %v476 = vunpack.c.l.b16 %v428
        %v477 = vunpack.c.l.b16 %v429
        %v478 = vunpack.c.l.b16 %v430
        %v479 = vunpack.c.l.b16 %v431
        %v480 = vunpack.c.l.b16 %v432
        %v481 = vunpack.c.l.b16 %v433
        %v482 = vunpack.c.l.b16 %v434
        %v483 = vunpack.c.l.b16 %v435
        %v484 = vunpack.c.l.b16 %v436
        %v485 = vunpack.c.l.b16 %v437
        %v486 = vunpack.c.l.b16 %v438
        %v487 = vunpack.c.l.b16 %v439
        %v488 = vunpack.c.l.b16 %v440
        %v489 = vpack.c.b16 %v474, %v473
        %v490 = vpack.c.b16 %v476, %v475
        %v491 = vpack.c.b16 %v478, %v477
        %v492 = vpack.c.b16 %v480, %v479
        %v493 = vpack.c.b16 %v482, %v481
        %v494 = vpack.c.b16 %v484, %v483
        %v495 = vpack.c.b16 %v486, %v485
        %v496 = vpack.c.b16 %v488, %v487
        %v521 = vunpack.c.l.b16 %v441
        %v522 = vunpack.c.l.b16 %v442
        %v523 = vunpack.c.l.b16 %v443
        %v524 = vunpack.c.l.b16 %v444
        %v525 = vunpack.c.l.b16 %v445
        %v526 = vunpack.c.l.b16 %v446
        %v527 = vunpack.c.l.b16 %v447
        %v528 = vunpack.c.l.b16 %v448
        %v529 = vunpack.c.l.b16 %v449
        %v530 = vunpack.c.l.b16 %v450
        %v531 = vunpack.c.l.b16 %v451
        %v532 = vunpack.c.l.b16 %v452
        %v533 = vunpack.c.l.b16 %v453
        %v534 = vunpack.c.l.b16 %v454
        %v535 = vunpack.c.l.b16 %v455
        %v536 = vunpack.c.l.b16 %v456
        %v537 = vpack.c.b16 %v522, %v521
        %v538 = vpack.c.b16 %v524, %v523
        %v539 = vpack.c.b16 %v526, %v525
        %v540 = vpack.c.b16 %v528, %v527
        %v541 = vpack.c.b16 %v530, %v529
        %v542 = vpack.c.b16 %v532, %v531
        %v543 = vpack.c.b16 %v534, %v533
        %v544 = vpack.c.b16 %v536, %v535
        %553 = vmatprep.subr.bf16.mxu0 0
        %554 = vmatpush1.bf16.msra.mxu0 %v537
        %555 = vmatprep.subr.bf16.mxu0 0
        %556 = vmatpush1.bf16.msra.mxu0 %v538
        %557 = vmatprep.subr.bf16.mxu0 0
        %558 = vmatpush1.bf16.msra.mxu0 %v539
        %559 = vmatprep.subr.bf16.mxu0 0
        %560 = vmatpush1.bf16.msra.mxu0 %v540
        %561 = vmatprep.subr.bf16.mxu0 0
        %562 = vmatpush1.bf16.msra.mxu0 %v541
        %563 = vmatprep.subr.bf16.mxu0 0
        %564 = vmatpush1.bf16.msra.mxu0 %v542
        %565 = vmatprep.subr.bf16.mxu0 0
        %566 = vmatpush1.bf16.msra.mxu0 %v543
        %567 = vmatprep.subr.bf16.mxu0 0
        %568 = vmatpush1.bf16.msra.mxu0 %v544
        %569 = vmatprep.subr.bf16.mxu0 0
        %570 = vmatpush1.bf16.msra.mxu0 0
        %571 = vmatprep.subr.bf16.mxu0 0
        %572 = vmatpush1.bf16.msra.mxu0 0
        %573 = vmatprep.subr.bf16.mxu0 0
        %574 = vmatpush1.bf16.msra.mxu0 0
        %575 = vmatprep.subr.bf16.mxu0 0
        %576 = vmatpush1.bf16.msra.mxu0 0
        %577 = vmatprep.subr.bf16.mxu0 0
        %578 = vmatpush1.bf16.msra.mxu0 0
        %579 = vmatprep.subr.bf16.mxu0 0
        %580 = vmatpush1.bf16.msra.mxu0 0
        %581 = vmatprep.subr.bf16.mxu0 0
        %582 = vmatpush1.bf16.msra.mxu0 0
        %583 = vmatprep.subr.bf16.mxu0 0
        %584 = vmatpush1.bf16.msra.mxu0 0
        %585 = vmatprep.mubr.bf16.mxu0 0
        %586 = vmatmul.mubr.bf16.gmra.mrb[0].mxu0 %v489
        %v587 = vpop.f32.mrb[0].mxu0
        %v588 = vadd.f32 0.0, %v587
        %v589 = vpop.f32.mrb[0].mxu0
        %v590 = vpop.f32.mrb[0].mxu0
        %v591 = vadd.f32 0.0, %v590
        %v592 = vpop.f32.mrb[0].mxu0
        %593 = vmatprep.mubr.bf16.mxu0 0
        %594 = vmatmul.mubr.bf16.gmra.mrb[0].mxu0 %v490
        %v595 = vpop.f32.mrb[0].mxu0
        %v596 = vadd.f32 0.0, %v595
        %v597 = vpop.f32.mrb[0].mxu0
        %v598 = vpop.f32.mrb[0].mxu0
        %v599 = vadd.f32 0.0, %v598
        %v600 = vpop.f32.mrb[0].mxu0
        %601 = vmatprep.mubr.bf16.mxu0 0
        %602 = vmatmul.mubr.bf16.gmra.mrb[0].mxu0 %v491
        %v603 = vpop.f32.mrb[0].mxu0
        %v604 = vadd.f32 0.0, %v603
        %v605 = vpop.f32.mrb[0].mxu0
        %v606 = vpop.f32.mrb[0].mxu0
        %v607 = vadd.f32 0.0, %v606
        %v608 = vpop.f32.mrb[0].mxu0
        %609 = vmatprep.mubr.bf16.mxu0 0
        %610 = vmatmul.mubr.bf16.gmra.mrb[0].mxu0 %v492
        %v611 = vpop.f32.mrb[0].mxu0
        %v612 = vadd.f32 0.0, %v611
        %v613 = vpop.f32.mrb[0].mxu0
        %v614 = vpop.f32.mrb[0].mxu0
        %v615 = vadd.f32 0.0, %v614
        %v616 = vpop.f32.mrb[0].mxu0
        %617 = vmatprep.mubr.bf16.mxu0 0
        %618 = vmatmul.mubr.bf16.gmra.mrb[0].mxu0 %v493
        %v619 = vpop.f32.mrb[0].mxu0
        %v620 = vadd.f32 0.0, %v619
        %v621 = vpop.f32.mrb[0].mxu0
        %v622 = vpop.f32.mrb[0].mxu0
        %v623 = vadd.f32 0.0, %v622
        %v624 = vpop.f32.mrb[0].mxu0
        %625 = vmatprep.mubr.bf16.mxu0 0
        %626 = vmatmul.mubr.bf16.gmra.mrb[0].mxu0 %v494
        %v627 = vpop.f32.mrb[0].mxu0
        %v628 = vadd.f32 0.0, %v627
        %v629 = vpop.f32.mrb[0].mxu0
        %v630 = vpop.f32.mrb[0].mxu0
        %v631 = vadd.f32 0.0, %v630
        %v632 = vpop.f32.mrb[0].mxu0
        %633 = vmatprep.mubr.bf16.mxu0 0
        %634 = vmatmul.mubr.bf16.gmra.mrb[0].mxu0 %v495
        %v635 = vpop.f32.mrb[0].mxu0
        %v636 = vadd.f32 0.0, %v635
        %v637 = vpop.f32.mrb[0].mxu0
        %v638 = vpop.f32.mrb[0].mxu0
        %v639 = vadd.f32 0.0, %v638
        %v640 = vpop.f32.mrb[0].mxu0
        %641 = vmatprep.mubr.bf16.mxu0 0
        %642 = vmatmul.mubr.bf16.gmra.mrb[0].mxu0 %v496
        %v643 = vpop.f32.mrb[0].mxu0
        %v644 = vadd.f32 0.0, %v643
        %v645 = vpop.f32.mrb[0].mxu0
        %v646 = vpop.f32.mrb[0].mxu0
        %v647 = vadd.f32 0.0, %v646
        %v648 = vpop.f32.mrb[0].mxu0
        %649 = vdwg.mxu0
        %v650 = vadd.f32 %v409, %v588
        %v651 = vadd.f32 %v410, %v591
        %v652 = vadd.f32 %v411, %v596
        %v653 = vadd.f32 %v412, %v599
        %v654 = vadd.f32 %v413, %v604
        %v655 = vadd.f32 %v414, %v607
        %v656 = vadd.f32 %v415, %v612
        %v657 = vadd.f32 %v416, %v615
        %v658 = vadd.f32 %v417, %v620
        %v659 = vadd.f32 %v418, %v623
        %v660 = vadd.f32 %v419, %v628
        %v661 = vadd.f32 %v420, %v631
        %v662 = vadd.f32 %v421, %v636
        %v663 = vadd.f32 %v422, %v639
        %v664 = vadd.f32 %v423, %v644
        %v665 = vadd.f32 %v424, %v647
        %vm666 = vcmask 15360
        %667 = vst.msk [vmem:[#allocation2] sm:$0xff] %vm666, %v650
        %668 = vst.msk [vmem:[#allocation2 + $0x8] sm:$0xff] %vm666, %v651
        %669 = vst.msk [vmem:[#allocation2 + $0x10] sm:$0xff] %vm666, %v652
        %670 = vst.msk [vmem:[#allocation2 + $0x18] sm:$0xff] %vm666, %v653
        %671 = vst.msk [vmem:[#allocation2 + $0x20] sm:$0xff] %vm666, %v654
        %672 = vst.msk [vmem:[#allocation2 + $0x28] sm:$0xff] %vm666, %v655
        %673 = vst.msk [vmem:[#allocation2 + $0x30] sm:$0xff] %vm666, %v656
        %674 = vst.msk [vmem:[#allocation2 + $0x38] sm:$0xff] %vm666, %v657
        %675 = vst.msk [vmem:[#allocation2 + $0x40] sm:$0xff] %vm666, %v658
        %676 = vst.msk [vmem:[#allocation2 + $0x48] sm:$0xff] %vm666, %v659
        %677 = vst.msk [vmem:[#allocation2 + $0x50] sm:$0xff] %vm666, %v660
        %678 = vst.msk [vmem:[#allocation2 + $0x58] sm:$0xff] %vm666, %v661
        %679 = vst.msk [vmem:[#allocation2 + $0x60] sm:$0xff] %vm666, %v662
        %680 = vst.msk [vmem:[#allocation2 + $0x68] sm:$0xff] %vm666, %v663
        %681 = vst.msk [vmem:[#allocation2 + $0x70] sm:$0xff] %vm666, %v664
        %682 = vst.msk [vmem:[#allocation2 + $0x78] sm:$0xff] %vm666, %v665
        %p683 = scmp.eq.s32.totalorder %s24, 1
        // Predicated region
        $region86: #{tpu_custom_call.1} parent=76 // pred_check
          %p684 = pneg %p683
        $region87: #{tpu_custom_call.1} parent=76 // pred_check_branch
          %686 = sbr.rel (%p684) target = $region89
        $region88: #{tpu_custom_call.1} parent=76 // pred_region
          %v687 = vld [vmem:[#allocation2] sm:$0xff]
          %v688 = vld [vmem:[#allocation2 + $0x8] sm:$0xff]
          %v689 = vld [vmem:[#allocation2 + $0x10] sm:$0xff]
          %v690 = vld [vmem:[#allocation2 + $0x18] sm:$0xff]
          %v691 = vld [vmem:[#allocation2 + $0x20] sm:$0xff]
          %v692 = vld [vmem:[#allocation2 + $0x28] sm:$0xff]
          %v693 = vld [vmem:[#allocation2 + $0x30] sm:$0xff]
          %v694 = vld [vmem:[#allocation2 + $0x38] sm:$0xff]
          %v695 = vld [vmem:[#allocation2 + $0x40] sm:$0xff]
          %v696 = vld [vmem:[#allocation2 + $0x48] sm:$0xff]
          %v697 = vld [vmem:[#allocation2 + $0x50] sm:$0xff]
          %v698 = vld [vmem:[#allocation2 + $0x58] sm:$0xff]
          %v699 = vld [vmem:[#allocation2 + $0x60] sm:$0xff]
          %v700 = vld [vmem:[#allocation2 + $0x68] sm:$0xff]
          %v701 = vld [vmem:[#allocation2 + $0x70] sm:$0xff]
          %v702 = vld [vmem:[#allocation2 + $0x78] sm:$0xff]
          %v703 = vld [vmem:[%s3] sm:$0x3]
          %v704 = vld [vmem:[%s384] sm:$0xff]
          %v705 = vld [vmem:[%s384 + $0x8] sm:$0xff]
          %v706 = vld [vmem:[%s384 + $0x10] sm:$0xff]
          %v707 = vld [vmem:[%s384 + $0x18] sm:$0xff]
          %v708 = vld [vmem:[%s384 + $0x20] sm:$0xff]
          %v709 = vld [vmem:[%s384 + $0x28] sm:$0xff]
          %v710 = vld [vmem:[%s384 + $0x30] sm:$0xff]
          %v711 = vld [vmem:[%s384 + $0x38] sm:$0xff]
          %v712 = vld [vmem:[%s384 + $0x40] sm:$0xff]
          %v713 = vld [vmem:[%s384 + $0x48] sm:$0xff]
          %v714 = vld [vmem:[%s384 + $0x50] sm:$0xff]
          %v715 = vld [vmem:[%s384 + $0x58] sm:$0xff]
          %v716 = vld [vmem:[%s384 + $0x60] sm:$0xff]
          %v717 = vld [vmem:[%s384 + $0x68] sm:$0xff]
          %v718 = vld [vmem:[%s384 + $0x70] sm:$0xff]
          %v719 = vld [vmem:[%s384 + $0x78] sm:$0xff]
          %v720 = vld [vmem:[%s3 + $0x2] sm:$0x3]
          %v722 = vsel %vm666, %v704, 0
          %v725 = vsel %vm666, %v705, 0
          %v728 = vsel %vm666, %v706, 0
          %v731 = vsel %vm666, %v707, 0
          %v734 = vsel %vm666, %v708, 0
          %v737 = vsel %vm666, %v709, 0
          %v740 = vsel %vm666, %v710, 0
          %v743 = vsel %vm666, %v711, 0
          %v746 = vsel %vm666, %v712, 0
          %v749 = vsel %vm666, %v713, 0
          %v752 = vsel %vm666, %v714, 0
          %v755 = vsel %vm666, %v715, 0
          %v758 = vsel %vm666, %v716, 0
          %v761 = vsel %vm666, %v717, 0
          %v764 = vsel %vm666, %v718, 0
          %v767 = vsel %vm666, %v719, 0
          %vm769 = vcmask 1041408
          %v771 = vsel %vm769, %v720, 0
          %773 = vmatprep.subr.mxu0 0.0
          %774 = vmatpush1.msra.mxu0 %v771
          %775 = vmatprep.subr.mxu0 0.0
          %776 = vmatpush1.msra.mxu0 0.0
          %777 = vmatprep.subr.mxu0 0.0
          %778 = vmatpush1.msra.mxu0 0.0
          %779 = vmatprep.subr.mxu0 0.0
          %780 = vmatpush1.msra.mxu0 0.0
          %781 = vmatprep.subr.mxu0 0.0
          %782 = vmatpush1.msra.mxu0 0.0
          %783 = vmatprep.subr.mxu0 0.0
          %784 = vmatpush1.msra.mxu0 0.0
          %785 = vmatprep.subr.mxu0 0.0
          %786 = vmatpush1.msra.mxu0 0.0
          %787 = vmatprep.subr.mxu0 0.0
          %788 = vmatpush1.msra.mxu0 0.0
          %789 = vmatprep.subr.mxu0 0.0
          %790 = vmatpush1.msra.mxu0 0.0
          %791 = vmatprep.subr.mxu0 0.0
          %792 = vmatpush1.msra.mxu0 0.0
          %793 = vmatprep.subr.mxu0 0.0
          %794 = vmatpush1.msra.mxu0 0.0
          %795 = vmatprep.subr.mxu0 0.0
          %796 = vmatpush1.msra.mxu0 0.0
          %797 = vmatprep.subr.mxu0 0.0
          %798 = vmatpush1.msra.mxu0 0.0
          %799 = vmatprep.subr.mxu0 0.0
          %800 = vmatpush1.msra.mxu0 0.0
          %801 = vmatprep.subr.mxu0 0.0
          %802 = vmatpush1.msra.mxu0 0.0
          %803 = vmatprep.subr.mxu0 0.0
          %804 = vmatpush1.msra.mxu0 0.0
          %805 = vmatprep.subr.mxu0 0.0
          %806 = vmatpush1.msra.mxu0 0.0
          %807 = vmatprep.subr.mxu0 0.0
          %808 = vmatpush1.msra.mxu0 0.0
          %809 = vmatprep.subr.mxu0 0.0
          %810 = vmatpush1.msra.mxu0 0.0
          %811 = vmatprep.subr.mxu0 0.0
          %812 = vmatpush1.msra.mxu0 0.0
          %813 = vmatprep.subr.mxu0 0.0
          %814 = vmatpush1.msra.mxu0 0.0
          %815 = vmatprep.subr.mxu0 0.0
          %816 = vmatpush1.msra.mxu0 0.0
          %817 = vmatprep.subr.mxu0 0.0
          %818 = vmatpush1.msra.mxu0 0.0
          %819 = vmatprep.subr.mxu0 0.0
          %820 = vmatpush1.msra.mxu0 0.0
          %821 = vmatprep.subr.mxu0 0.0
          %822 = vmatpush1.msra.mxu0 0.0
          %823 = vmatprep.subr.mxu0 0.0
          %824 = vmatpush1.msra.mxu0 0.0
          %825 = vmatprep.subr.mxu0 0.0
          %826 = vmatpush1.msra.mxu0 0.0
          %827 = vmatprep.subr.mxu0 0.0
          %828 = vmatpush1.msra.mxu0 0.0
          %829 = vmatprep.subr.mxu0 0.0
          %830 = vmatpush1.msra.mxu0 0.0
          %831 = vmatprep.subr.mxu0 0.0
          %832 = vmatpush1.msra.mxu0 0.0
          %833 = vmatprep.subr.mxu0 0.0
          %834 = vmatpush1.msra.mxu0 0.0
          %835 = vmatprep.subr.mxu0 0.0
          %836 = vmatpush1.msra.mxu0 0.0
          %837 = vmatprep.mubr.f32.mxu0 0.0
          %838 = vmatmul.mubr.f32.gmra.mrb[0].mxu0 %v722
          %v839 = vpop.f32.mrb[0].mxu0
          %v840 = vadd.f32 0.0, %v839
          %v841 = vpop.f32.mrb[0].mxu0
          %842 = vmatprep.mubr.f32.mxu0 0.0
          %843 = vmatmul.mubr.f32.gmra.mrb[0].mxu0 %v725
          %v844 = vpop.f32.mrb[0].mxu0
          %v845 = vadd.f32 0.0, %v844
          %v846 = vpop.f32.mrb[0].mxu0
          %847 = vmatprep.mubr.f32.mxu0 0.0
          %848 = vmatmul.mubr.f32.gmra.mrb[0].mxu0 %v728
          %v849 = vpop.f32.mrb[0].mxu0
          %v850 = vadd.f32 0.0, %v849
          %v851 = vpop.f32.mrb[0].mxu0
          %852 = vmatprep.mubr.f32.mxu0 0.0
          %853 = vmatmul.mubr.f32.gmra.mrb[0].mxu0 %v731
          %v854 = vpop.f32.mrb[0].mxu0
          %v855 = vadd.f32 0.0, %v854
          %v856 = vpop.f32.mrb[0].mxu0
          %857 = vmatprep.mubr.f32.mxu0 0.0
          %858 = vmatmul.mubr.f32.gmra.mrb[0].mxu0 %v734
          %v859 = vpop.f32.mrb[0].mxu0
          %v860 = vadd.f32 0.0, %v859
          %v861 = vpop.f32.mrb[0].mxu0
          %862 = vmatprep.mubr.f32.mxu0 0.0
          %863 = vmatmul.mubr.f32.gmra.mrb[0].mxu0 %v737
          %v864 = vpop.f32.mrb[0].mxu0
          %v865 = vadd.f32 0.0, %v864
          %v866 = vpop.f32.mrb[0].mxu0
          %867 = vmatprep.mubr.f32.mxu0 0.0
          %868 = vmatmul.mubr.f32.gmra.mrb[0].mxu0 %v740
          %v869 = vpop.f32.mrb[0].mxu0
          %v870 = vadd.f32 0.0, %v869
          %v871 = vpop.f32.mrb[0].mxu0
          %872 = vmatprep.mubr.f32.mxu0 0.0
          %873 = vmatmul.mubr.f32.gmra.mrb[0].mxu0 %v743
          %v874 = vpop.f32.mrb[0].mxu0
          %v875 = vadd.f32 0.0, %v874
          %v876 = vpop.f32.mrb[0].mxu0
          %877 = vmatprep.mubr.f32.mxu0 0.0
          %878 = vmatmul.mubr.f32.gmra.mrb[0].mxu0 %v746
          %v879 = vpop.f32.mrb[0].mxu0
          %v880 = vadd.f32 0.0, %v879
          %v881 = vpop.f32.mrb[0].mxu0
          %882 = vmatprep.mubr.f32.mxu0 0.0
          %883 = vmatmul.mubr.f32.gmra.mrb[0].mxu0 %v749
          %v884 = vpop.f32.mrb[0].mxu0
          %v885 = vadd.f32 0.0, %v884
          %v886 = vpop.f32.mrb[0].mxu0
          %887 = vmatprep.mubr.f32.mxu0 0.0
          %888 = vmatmul.mubr.f32.gmra.mrb[0].mxu0 %v752
          %v889 = vpop.f32.mrb[0].mxu0
          %v890 = vadd.f32 0.0, %v889
          %v891 = vpop.f32.mrb[0].mxu0
          %892 = vmatprep.mubr.f32.mxu0 0.0
          %893 = vmatmul.mubr.f32.gmra.mrb[0].mxu0 %v755
          %v894 = vpop.f32.mrb[0].mxu0
          %v895 = vadd.f32 0.0, %v894
          %v896 = vpop.f32.mrb[0].mxu0
          %897 = vmatprep.mubr.f32.mxu0 0.0
          %898 = vmatmul.mubr.f32.gmra.mrb[0].mxu0 %v758
          %v899 = vpop.f32.mrb[0].mxu0
          %v900 = vadd.f32 0.0, %v899
          %v901 = vpop.f32.mrb[0].mxu0
          %902 = vmatprep.mubr.f32.mxu0 0.0
          %903 = vmatmul.mubr.f32.gmra.mrb[0].mxu0 %v761
          %v904 = vpop.f32.mrb[0].mxu0
          %v905 = vadd.f32 0.0, %v904
          %v906 = vpop.f32.mrb[0].mxu0
          %907 = vmatprep.mubr.f32.mxu0 0.0
          %908 = vmatmul.mubr.f32.gmra.mrb[0].mxu0 %v764
          %v909 = vpop.f32.mrb[0].mxu0
          %v910 = vadd.f32 0.0, %v909
          %v911 = vpop.f32.mrb[0].mxu0
          %912 = vmatprep.mubr.f32.mxu0 0.0
          %913 = vmatmul.mubr.f32.gmra.mrb[0].mxu0 %v767
          %v914 = vpop.f32.mrb[0].mxu0
          %v915 = vadd.f32 0.0, %v914
          %v916 = vpop.f32.mrb[0].mxu0
          %917 = vdwg.mxu0
          %v919 = vsel %vm666, %v687, 0
          %v922 = vsel %vm666, %v688, 0
          %v925 = vsel %vm666, %v689, 0
          %v928 = vsel %vm666, %v690, 0
          %v931 = vsel %vm666, %v691, 0
          %v934 = vsel %vm666, %v692, 0
          %v937 = vsel %vm666, %v693, 0
          %v940 = vsel %vm666, %v694, 0
          %v943 = vsel %vm666, %v695, 0
          %v946 = vsel %vm666, %v696, 0
          %v949 = vsel %vm666, %v697, 0
          %v952 = vsel %vm666, %v698, 0
          %v955 = vsel %vm666, %v699, 0
          %v958 = vsel %vm666, %v700, 0
          %v961 = vsel %vm666, %v701, 0
          %v964 = vsel %vm666, %v702, 0
          %v967 = vsel %vm769, %v703, 0
          %969 = vmatprep.subr.mxu0 0.0
          %970 = vmatpush1.msra.mxu0 %v967
          %971 = vmatprep.subr.mxu0 0.0
          %972 = vmatpush1.msra.mxu0 0.0
          %973 = vmatprep.subr.mxu0 0.0
          %974 = vmatpush1.msra.mxu0 0.0
          %975 = vmatprep.subr.mxu0 0.0
          %976 = vmatpush1.msra.mxu0 0.0
          %977 = vmatprep.subr.mxu0 0.0
          %978 = vmatpush1.msra.mxu0 0.0
          %979 = vmatprep.subr.mxu0 0.0
          %980 = vmatpush1.msra.mxu0 0.0
          %981 = vmatprep.subr.mxu0 0.0
          %982 = vmatpush1.msra.mxu0 0.0
          %983 = vmatprep.subr.mxu0 0.0
          %984 = vmatpush1.msra.mxu0 0.0
          %985 = vmatprep.subr.mxu0 0.0
          %986 = vmatpush1.msra.mxu0 0.0
          %987 = vmatprep.subr.mxu0 0.0
          %988 = vmatpush1.msra.mxu0 0.0
          %989 = vmatprep.subr.mxu0 0.0
          %990 = vmatpush1.msra.mxu0 0.0
          %991 = vmatprep.subr.mxu0 0.0
          %992 = vmatpush1.msra.mxu0 0.0
          %993 = vmatprep.subr.mxu0 0.0
          %994 = vmatpush1.msra.mxu0 0.0
          %995 = vmatprep.subr.mxu0 0.0
          %996 = vmatpush1.msra.mxu0 0.0
          %997 = vmatprep.subr.mxu0 0.0
          %998 = vmatpush1.msra.mxu0 0.0
          %999 = vmatprep.subr.mxu0 0.0
          %1000 = vmatpush1.msra.mxu0 0.0
          %1001 = vmatprep.subr.mxu0 0.0
          %1002 = vmatpush1.msra.mxu0 0.0
          %1003 = vmatprep.subr.mxu0 0.0
          %1004 = vmatpush1.msra.mxu0 0.0
          %1005 = vmatprep.subr.mxu0 0.0
          %1006 = vmatpush1.msra.mxu0 0.0
          %1007 = vmatprep.subr.mxu0 0.0
          %1008 = vmatpush1.msra.mxu0 0.0
          %1009 = vmatprep.subr.mxu0 0.0
          %1010 = vmatpush1.msra.mxu0 0.0
          %1011 = vmatprep.subr.mxu0 0.0
          %1012 = vmatpush1.msra.mxu0 0.0
          %1013 = vmatprep.subr.mxu0 0.0
          %1014 = vmatpush1.msra.mxu0 0.0
          %1015 = vmatprep.subr.mxu0 0.0
          %1016 = vmatpush1.msra.mxu0 0.0
          %1017 = vmatprep.subr.mxu0 0.0
          %1018 = vmatpush1.msra.mxu0 0.0
          %1019 = vmatprep.subr.mxu0 0.0
          %1020 = vmatpush1.msra.mxu0 0.0
          %1021 = vmatprep.subr.mxu0 0.0
          %1022 = vmatpush1.msra.mxu0 0.0
          %1023 = vmatprep.subr.mxu0 0.0
          %1024 = vmatpush1.msra.mxu0 0.0
          %1025 = vmatprep.subr.mxu0 0.0
          %1026 = vmatpush1.msra.mxu0 0.0
          %1027 = vmatprep.subr.mxu0 0.0
          %1028 = vmatpush1.msra.mxu0 0.0
          %1029 = vmatprep.subr.mxu0 0.0
          %1030 = vmatpush1.msra.mxu0 0.0
          %1031 = vmatprep.subr.mxu0 0.0
          %1032 = vmatpush1.msra.mxu0 0.0
          %1033 = vmatprep.mubr.f32.mxu0 0.0
          %1034 = vmatmul.mubr.f32.gmra.mrb[0].mxu0 %v919
          %v1035 = vpop.f32.mrb[0].mxu0
          %v1036 = vadd.f32 %v840, %v1035
          %v1037 = vpop.f32.mrb[0].mxu0
          %1038 = vmatprep.mubr.f32.mxu0 0.0
          %1039 = vmatmul.mubr.f32.gmra.mrb[0].mxu0 %v922
          %v1040 = vpop.f32.mrb[0].mxu0
          %v1041 = vadd.f32 %v845, %v1040
          %v1042 = vpop.f32.mrb[0].mxu0
          %1043 = vmatprep.mubr.f32.mxu0 0.0
          %1044 = vmatmul.mubr.f32.gmra.mrb[0].mxu0 %v925
          %v1045 = vpop.f32.mrb[0].mxu0
          %v1046 = vadd.f32 %v850, %v1045
          %v1047 = vpop.f32.mrb[0].mxu0
          %1048 = vmatprep.mubr.f32.mxu0 0.0
          %1049 = vmatmul.mubr.f32.gmra.mrb[0].mxu0 %v928
          %v1050 = vpop.f32.mrb[0].mxu0
          %v1051 = vadd.f32 %v855, %v1050
          %v1052 = vpop.f32.mrb[0].mxu0
          %1053 = vmatprep.mubr.f32.mxu0 0.0
          %1054 = vmatmul.mubr.f32.gmra.mrb[0].mxu0 %v931
          %v1055 = vpop.f32.mrb[0].mxu0
          %v1056 = vadd.f32 %v860, %v1055
          %v1057 = vpop.f32.mrb[0].mxu0
          %1058 = vmatprep.mubr.f32.mxu0 0.0
          %1059 = vmatmul.mubr.f32.gmra.mrb[0].mxu0 %v934
          %v1060 = vpop.f32.mrb[0].mxu0
          %v1061 = vadd.f32 %v865, %v1060
          %v1062 = vpop.f32.mrb[0].mxu0
          %1063 = vmatprep.mubr.f32.mxu0 0.0
          %1064 = vmatmul.mubr.f32.gmra.mrb[0].mxu0 %v937
          %v1065 = vpop.f32.mrb[0].mxu0
          %v1066 = vadd.f32 %v870, %v1065
          %v1067 = vpop.f32.mrb[0].mxu0
          %1068 = vmatprep.mubr.f32.mxu0 0.0
          %1069 = vmatmul.mubr.f32.gmra.mrb[0].mxu0 %v940
          %v1070 = vpop.f32.mrb[0].mxu0
          %v1071 = vadd.f32 %v875, %v1070
          %v1072 = vpop.f32.mrb[0].mxu0
          %1073 = vmatprep.mubr.f32.mxu0 0.0
          %1074 = vmatmul.mubr.f32.gmra.mrb[0].mxu0 %v943
          %v1075 = vpop.f32.mrb[0].mxu0
          %v1076 = vadd.f32 %v880, %v1075
          %v1077 = vpop.f32.mrb[0].mxu0
          %1078 = vmatprep.mubr.f32.mxu0 0.0
          %1079 = vmatmul.mubr.f32.gmra.mrb[0].mxu0 %v946
          %v1080 = vpop.f32.mrb[0].mxu0
          %v1081 = vadd.f32 %v885, %v1080
          %v1082 = vpop.f32.mrb[0].mxu0
          %1083 = vmatprep.mubr.f32.mxu0 0.0
          %1084 = vmatmul.mubr.f32.gmra.mrb[0].mxu0 %v949
          %v1085 = vpop.f32.mrb[0].mxu0
          %v1086 = vadd.f32 %v890, %v1085
          %v1087 = vpop.f32.mrb[0].mxu0
          %1088 = vmatprep.mubr.f32.mxu0 0.0
          %1089 = vmatmul.mubr.f32.gmra.mrb[0].mxu0 %v952
          %v1090 = vpop.f32.mrb[0].mxu0
          %v1091 = vadd.f32 %v895, %v1090
          %v1092 = vpop.f32.mrb[0].mxu0
          %1093 = vmatprep.mubr.f32.mxu0 0.0
          %1094 = vmatmul.mubr.f32.gmra.mrb[0].mxu0 %v955
          %v1095 = vpop.f32.mrb[0].mxu0
          %v1096 = vadd.f32 %v900, %v1095
          %v1097 = vpop.f32.mrb[0].mxu0
          %1098 = vmatprep.mubr.f32.mxu0 0.0
          %1099 = vmatmul.mubr.f32.gmra.mrb[0].mxu0 %v958
          %v1100 = vpop.f32.mrb[0].mxu0
          %v1101 = vadd.f32 %v905, %v1100
          %v1102 = vpop.f32.mrb[0].mxu0
          %1103 = vmatprep.mubr.f32.mxu0 0.0
          %1104 = vmatmul.mubr.f32.gmra.mrb[0].mxu0 %v961
          %v1105 = vpop.f32.mrb[0].mxu0
          %v1106 = vadd.f32 %v910, %v1105
          %v1107 = vpop.f32.mrb[0].mxu0
          %1108 = vmatprep.mubr.f32.mxu0 0.0
          %1109 = vmatmul.mubr.f32.gmra.mrb[0].mxu0 %v964
          %v1110 = vpop.f32.mrb[0].mxu0
          %v1111 = vadd.f32 %v915, %v1110
          %v1112 = vpop.f32.mrb[0].mxu0
          %1113 = vdwg.mxu0
          %v1114 = vld [vmem:[%s4] sm:$0x1]
          %v1116 = vlaneseq
          %v1117 = vshrl.u32 %v1116, 7
          %v1118 = vsub.s32 0, %v1117
          %v1119 = vrot.slane %v1114, %v1118
          %v1121 = vadd.f32 %v1036, %v1119
          %v1122 = vadd.f32 %v1041, %v1119
          %v1123 = vadd.f32 %v1046, %v1119
          %v1124 = vadd.f32 %v1051, %v1119
          %v1125 = vadd.f32 %v1056, %v1119
          %v1126 = vadd.f32 %v1061, %v1119
          %v1127 = vadd.f32 %v1066, %v1119
          %v1128 = vadd.f32 %v1071, %v1119
          %v1129 = vadd.f32 %v1076, %v1119
          %v1130 = vadd.f32 %v1081, %v1119
          %v1131 = vadd.f32 %v1086, %v1119
          %v1132 = vadd.f32 %v1091, %v1119
          %v1133 = vadd.f32 %v1096, %v1119
          %v1134 = vadd.f32 %v1101, %v1119
          %v1135 = vadd.f32 %v1106, %v1119
          %v1136 = vadd.f32 %v1111, %v1119
          %v1137 = vtanh.pop %v1121
          %v1138 = vtanh.pop %v1122
          %v1139 = vtanh.pop %v1123
          %v1140 = vtanh.pop %v1124
          %v1141 = vtanh.pop %v1125
          %v1142 = vtanh.pop %v1126
          %v1143 = vtanh.pop %v1127
          %v1144 = vtanh.pop %v1128
          %v1145 = vtanh.pop %v1129
          %v1146 = vtanh.pop %v1130
          %v1147 = vtanh.pop %v1131
          %v1148 = vtanh.pop %v1132
          %v1149 = vtanh.pop %v1133
          %v1150 = vtanh.pop %v1134
          %v1151 = vtanh.pop %v1135
          %v1152 = vtanh.pop %v1136
          %1153 = vst [vmem:[%s372] sm:$0xff] %v1137
          %1154 = vst [vmem:[%s372 + $0x8] sm:$0xff] %v1138
          %1155 = vst [vmem:[%s372 + $0x10] sm:$0xff] %v1139
          %1156 = vst [vmem:[%s372 + $0x18] sm:$0xff] %v1140
          %1157 = vst [vmem:[%s372 + $0x20] sm:$0xff] %v1141
          %1158 = vst [vmem:[%s372 + $0x28] sm:$0xff] %v1142
          %1159 = vst [vmem:[%s372 + $0x30] sm:$0xff] %v1143
          %1160 = vst [vmem:[%s372 + $0x38] sm:$0xff] %v1144
          %1161 = vst [vmem:[%s372 + $0x40] sm:$0xff] %v1145
          %1162 = vst [vmem:[%s372 + $0x48] sm:$0xff] %v1146
          %1163 = vst [vmem:[%s372 + $0x50] sm:$0xff] %v1147
          %1164 = vst [vmem:[%s372 + $0x58] sm:$0xff] %v1148
          %1165 = vst [vmem:[%s372 + $0x60] sm:$0xff] %v1149
          %1166 = vst [vmem:[%s372 + $0x68] sm:$0xff] %v1150
          %1167 = vst [vmem:[%s372 + $0x70] sm:$0xff] %v1151
          %1168 = vst [vmem:[%s372 + $0x78] sm:$0xff] %v1152
        $region89: #{tpu_custom_call.1} parent=76 // pred_fallthru
          _
        %s1169 = sand.u32 %s161, 1
        %s1170 = scalar_lea.sflag [#allocation5], %s1169
        %s1171 = sand.u32 %s161, 1
        %s1172 = smul.addr %s1171, 128
        %s1173 = scalar_lea.vmem [#allocation4], %s1172
        // Predicated region
        $region90: #{tpu_custom_call.1} parent=76 // pred_check
          %p1174 = pneg %p171
        $region91: #{tpu_custom_call.1} parent=76 // pred_check_branch
          %1176 = sbr.rel (%p1174) target = $region93
        $region92: #{tpu_custom_call.1} parent=76 // pred_region
          %s1177 = smul.u32 16, %s23
          %s1179 = ssub.s32 2048, 2048
          %1180 = vsyncadd %s1170, %s1179
          %s1181 = smul.addr %s1177, 128
          %s1182 = scalar_lea.hbm %s5, %s1181
          %s1183 = sshll.u32 %s1173, 4
          %s1184 = int_to_ptr.vmem [resolvable:$true] %s1183
          %1189 = dma.vmem_to_hbm [thread:$0]  %s1184, 2048, %s1182, %s1170, 128, 128, 8
        $region93: #{tpu_custom_call.1} parent=76 // pred_fallthru
          _
      $region77: #{tpu_custom_call.1} parent=5 // pred_fallthru
        _
      %p1190 = scmp.le.s32.totalorder 2, %s14
      // Predicated region
      $region94: #{tpu_custom_call.1} parent=5 // pred_check
        %p1191 = pneg %p1190
      $region95: #{tpu_custom_call.1} parent=5 // pred_check_branch
        %1193 = sbr.rel (%p1191) target = $region97
      $region96: #{tpu_custom_call.1} parent=5 // pred_region
        %s1194 = ssub.s32 %s14, 2
        // Predicated region
        $region98: #{tpu_custom_call.1} parent=96 // pred_check
          %p1195 = pneg %p177
        $region99: #{tpu_custom_call.1} parent=96 // pred_check_branch
          %1197 = sbr.rel (%p1195) target = $region101
        $region100: #{tpu_custom_call.1} parent=96 // pred_region
          %s1198 = sand.u32 %s162, 1
          %s1199 = scalar_lea.sflag [#allocation5], %s1198
          %s1200 = sand.u32 %s162, 1
          %s1201 = smul.addr %s1200, 128
          %s1202 = scalar_lea.vmem [#allocation4], %s1201
          %1203 = dma.done %s1199, 2048
        $region101: #{tpu_custom_call.1} parent=96 // pred_fallthru
          _
      $region97: #{tpu_custom_call.1} parent=5 // pred_fallthru
        _
    $region6: #{tpu_custom_call.1} parent=1 // loop_footer
      %s18 = sadd.s32 1, %s14
    $region7: #{tpu_custom_call.1} parent=1 // loop_footer_branch
      %13 = sbr.rel target = $region3
    $region8: #{tpu_custom_call.1} parent=1 // loop_exit
      _
    %1204 = vsyncpa [#allocation5], 1
    %s1205 = scalar_lea.sflag [#allocation5], 1
    %1206 = vsyncpa %s1205, 1

</llo_original>
